<compile_context>
chip_gen: v5e
topology: v5e:2x2
jax: 0.10.0
libtpu: 0.0.40
codegen_flags: <defaults>
</compile_context>

<pallas_src>
import functools

import jax
import jax.numpy as jnp
from jax.experimental import pallas as pl
from jax.experimental.pallas import tpu as pltpu

LANE = 128
_MIN_PALLAS_ELEMS = 1024  # below this, kernel launch overhead dominates -> plain jnp


# --------------------------- tiling helpers ---------------------------------
def _cdiv(a, b):
    return -(-a // b)


def _round_up(x, m):
    return _cdiv(x, m) * m


def _default_tr_max():
    """Per-generation block-row cap.

    v5e: 2048 rows (1 MiB f32/block) - slower HBM means 4096 buys little.
    v6e/v7x (and unknown): 4096 rows (2 MiB f32/block); fits comfortably under
    v7x's 64 MiB physical VMEM with the explicit vmem_limit_bytes we set.
    """
    try:
        kind = jax.devices()[0].device_kind.lower()
    except Exception:
        return 2048
    if "v5 lite" in kind or "v5lite" in kind or "v5e" in kind:
        return 2048
    return 4096


def _sublane_unit(*dtypes):
    """Sublane packing granularity: 8 (32-bit), 16 (16-bit), 32 (8-bit)."""
    unit = 8
    for d in dtypes:
        bits = jnp.dtype(d).itemsize * 8
        unit = max(unit, 8 * max(1, 32 // bits))
    return unit


def _vmem_limit_bytes(tr, itemsizes):
    """Scoped-VMEM budget: double-buffered pipeline blocks for each streamed
    array + allowance for f32 in-kernel temporaries + headroom."""
    bufs = sum(2 * tr * LANE * int(isz) for isz in itemsizes)
    temps = 6 * tr * LANE * 4
    return int(bufs + temps + (4 << 20))


def _as_lane_slab(a, rows):
    """Flatten to (rows, 128). Lane-aligned sizes reshape for free; ragged
    sizes are zero-padded by < 128 elements (zero diff / zero weight leaves
    the weighted sums unchanged)."""
    flat = a.reshape(-1)
    pad = rows * LANE - flat.shape[0]
    if pad:
        # TODO(synk): ragged (n % 128 != 0) inputs still cost one HBM copy per
        # array for this tiny pad; a 1-D-block kernel path could remove it.
        flat = jnp.pad(flat, (0, pad))
    return flat.reshape(rows, LANE)


# --------------------------- kernels -----------------------------------------
def _row_mask(c, j, spc, tr, rows):
    """(tr, 1) bool mask of rows that are inside the real array.  Also zeroes
    the whole block for the clamped overhang step of an odd block count."""
    g = c * spc + j
    rid = jax.lax.broadcasted_iota(jnp.int32, (tr, 1), 0) + g * tr
    return rid < rows


def _reduce_kernel_mean(x_ref, t_ref, w_ref, sq_ref, ws_ref, *,
                        rows, tr, spc, need_mask):
    """Accumulate sum((x-t)^2*w) and sum(w) into (8,128) f32 output slabs.

    Grid = (groups, steps_per_group).  The output block index depends only on
    the group axis, so the (8,128) output blocks stay VMEM-resident across the
    'arbitrary' inner axis and act as accumulators (VPU adds only)."""
    c = pl.program_id(0)
    j = pl.program_id(1)

    @pl.when(j == 0)
    def _():
        sq_ref[...] = jnp.zeros_like(sq_ref)
        ws_ref[...] = jnp.zeros_like(ws_ref)

    x = x_ref[...].astype(jnp.float32)
    t = t_ref[...].astype(jnp.float32)
    w = w_ref[...].astype(jnp.float32)
    d = x - t
    sq = d * d * w
    if need_mask:
        m = _row_mask(c, j, spc, tr, rows)
        sq = jnp.where(m, sq, 0.0)
        w = jnp.where(m, w, 0.0)
    # (tr,128) -> (tr/8, 8, 128), reduce the leading axis: pure vreg adds.
    sq_ref[...] += sq.reshape(-1, 8, LANE).sum(axis=0)
    ws_ref[...] += w.reshape(-1, 8, LANE).sum(axis=0)


def _reduce_kernel_sum(x_ref, t_ref, w_ref, sq_ref, *,
                       rows, tr, spc, need_mask):
    """Same as the 'mean' kernel but without the sum(weight) accumulator."""
    c = pl.program_id(0)
    j = pl.program_id(1)

    @pl.when(j == 0)
    def _():
        sq_ref[...] = jnp.zeros_like(sq_ref)

    x = x_ref[...].astype(jnp.float32)
    t = t_ref[...].astype(jnp.float32)
    w = w_ref[...].astype(jnp.float32)
    d = x - t
    sq = d * d * w
    if need_mask:
        m = _row_mask(c, j, spc, tr, rows)
        sq = jnp.where(m, sq, 0.0)
    sq_ref[...] += sq.reshape(-1, 8, LANE).sum(axis=0)


def _elementwise_kernel(x_ref, t_ref, w_ref, o_ref):
    x = x_ref[...].astype(jnp.float32)
    t = t_ref[...].astype(jnp.float32)
    w = w_ref[...].astype(jnp.float32)
    d = x - t
    o_ref[...] = (d * d * w).astype(o_ref.dtype)


# --------------------------- pallas_call wrappers -----------------------------
def _reduce(x2d, t2d, w2d, rows, tr, reduction):
    """Return (sum((x-t)^2*w), sum(w) or None) as f32 scalars."""
    nb = _cdiv(rows, tr)                     # number of row blocks
    groups = 2 if nb >= 2 else 1             # unconditional 2-TC split
    spc = _cdiv(nb, groups)                  # inner steps per group
    need_mask = (rows % tr != 0) or (nb % groups != 0)
    nb_last = nb - 1

    def in_map(c, j):
        # Clamp so the possible overhang step of the last group re-reads the
        # last valid block; its contribution is masked out in-kernel.
        return (jnp.minimum(c * spc + j, nb_last), 0)

    def out_map(c, j):
        return (c, 0)

    vmem = _vmem_limit_bytes(
        tr, [x2d.dtype.itemsize, t2d.dtype.itemsize, w2d.dtype.itemsize])

    want_wsum = reduction == "mean"
    if want_wsum:
        kern = functools.partial(_reduce_kernel_mean, rows=rows, tr=tr,
                                 spc=spc, need_mask=need_mask)
        out_shape = (jax.ShapeDtypeStruct((groups * 8, LANE), jnp.float32),
                     jax.ShapeDtypeStruct((groups * 8, LANE), jnp.float32))
        out_specs = [pl.BlockSpec((8, LANE), out_map),
                     pl.BlockSpec((8, LANE), out_map)]
    else:
        kern = functools.partial(_reduce_kernel_sum, rows=rows, tr=tr,
                                 spc=spc, need_mask=need_mask)
        out_shape = jax.ShapeDtypeStruct((groups * 8, LANE), jnp.float32)
        out_specs = pl.BlockSpec((8, LANE), out_map)

    res = pl.pallas_call(
        kern,
        out_shape=out_shape,
        grid_spec=pltpu.PrefetchScalarGridSpec(
            num_scalar_prefetch=0,
            grid=(groups, spc),
            in_specs=[pl.BlockSpec((tr, LANE), in_map)] * 3,
            out_specs=out_specs,
        ),
        compiler_params=pltpu.CompilerParams(
            dimension_semantics=("parallel", "arbitrary"),
            vmem_limit_bytes=vmem,
        ),
    )(x2d, t2d, w2d)

    # Tiny epilogue reduce (<= 2*8*128 f32) + divide happen outside the kernel.
    if want_wsum:
        sq_part, w_part = res
        return jnp.sum(sq_part), jnp.sum(w_part)
    return jnp.sum(res), None


def _elementwise(x2d, t2d, w2d, rows, tr, out_dtype):
    nb = _cdiv(rows, tr)
    vmem = _vmem_limit_bytes(
        tr, [x2d.dtype.itemsize, t2d.dtype.itemsize, w2d.dtype.itemsize,
             jnp.dtype(out_dtype).itemsize])
    return pl.pallas_call(
        _elementwise_kernel,
        out_shape=jax.ShapeDtypeStruct((rows, LANE), out_dtype),
        grid_spec=pltpu.PrefetchScalarGridSpec(
            num_scalar_prefetch=0,
            grid=(nb,),
            in_specs=[pl.BlockSpec((tr, LANE), lambda i: (i, 0))] * 3,
            out_specs=pl.BlockSpec((tr, LANE), lambda i: (i, 0)),
        ),
        compiler_params=pltpu.CompilerParams(
            dimension_semantics=("parallel",),
            vmem_limit_bytes=vmem,
        ),
    )(x2d, t2d, w2d)


# --------------------------- public entry point -------------------------------
def weighted_mse_loss(inp, target, weight, reduction="mean", *, block_rows=None):
    if weight is None:
        # TODO(synk): weight=None falls back to F.l1_loss in the reference
        # module; implemented in plain JAX (not the hot path of this module).
        diff = jnp.abs(inp.astype(jnp.float32) - target.astype(jnp.float32))
        if reduction == "mean":
            return jnp.mean(diff)
        if reduction == "none":
            return diff.astype(jnp.result_type(inp.dtype, target.dtype))
        return jnp.sum(diff)

    out_dtype = jnp.result_type(inp.dtype, target.dtype, weight.dtype)
    n = inp.size

    # Tiny tensors: kernel launch + pipeline warmup dominates -> plain jnp.
    if n < _MIN_PALLAS_ELEMS:
        x = inp.astype(jnp.float32)
        t = target.astype(jnp.float32)
        w = weight.astype(jnp.float32)
        rst = (x - t) ** 2 * w
        if reduction == "mean":
            return jnp.sum(rst) / jnp.sum(w)
        if reduction == "none":
            return rst.astype(out_dtype)
        return jnp.sum(rst)

    sub = _sublane_unit(inp.dtype, target.dtype, weight.dtype, out_dtype)
    tr_max = block_rows if block_rows is not None else _default_tr_max()
    tr_max = max(sub, (tr_max // sub) * sub)

    rows = _cdiv(n, LANE)                    # real rows of valid data
    tr = min(tr_max, _round_up(rows, sub))   # block rows (sublane-aligned)

    x2d = _as_lane_slab(inp, rows)
    t2d = _as_lane_slab(target, rows)
    w2d = _as_lane_slab(weight, rows)

    if reduction == "none":
        out2d = _elementwise(x2d, t2d, w2d, rows, tr, out_dtype)
        flat = out2d.reshape(-1)
        if flat.shape[0] != n:
            flat = flat[:n]
        return flat.reshape(inp.shape)

    sq_sum, w_sum = _reduce(x2d, t2d, w2d, rows, tr, reduction)
    if reduction == "mean":
        return sq_sum / w_sum
    return sq_sum  # 'sum'


# --------------------------- demo / correctness check -------------------------
if __name__ == "__main__":
    key = jax.random.PRNGKey(0)

    def refs(x, t, w):
        e = (x.astype(jnp.float32) - t.astype(jnp.float32)) ** 2 * w.astype(jnp.float32)
        return jnp.sum(e) / jnp.sum(w), jnp.sum(e), e

    # Case 1: small NCHW demo shape, lane-aligned (zero-copy single-block path).
    k1, k2, k3, key = jax.random.split(key, 4)
    shape = (2, 4, 16, 16)
    x = jax.random.normal(k1, shape, dtype=jnp.float32)
    t = jax.random.normal(k2, shape, dtype=jnp.float32)
    w = jax.random.uniform(k3, shape, dtype=jnp.float32)

    lm = weighted_mse_loss(x, t, w, "mean")
    ls = weighted_mse_loss(x, t, w, "sum")
    ln = weighted_mse_loss(x, t, w, "none")
    jax.block_until_ready((lm, ls, ln))
    rm, rs, rn = refs(x, t, w)
    assert jnp.allclose(lm, rm, rtol=1e-5, atol=1e-5)
    assert jnp.allclose(ls, rs, rtol=1e-5, atol=1e-4)
    assert jnp.allclose(ln, rn, rtol=1e-5, atol=1e-5)

    # Case 2: ragged shape (exercises tiny lane-pad + in-kernel row masking).
    k1, k2, k3, key = jax.random.split(key, 4)
    shape2 = (3, 5, 17, 13)
    x2 = jax.random.normal(k1, shape2, dtype=jnp.float32)
    t2 = jax.random.normal(k2, shape2, dtype=jnp.float32)
    w2 = jax.random.uniform(k3, shape2, dtype=jnp.float32)
    lm2 = weighted_mse_loss(x2, t2, w2, "mean")
    ls2 = weighted_mse_loss(x2, t2, w2, "sum")
    ln2 = weighted_mse_loss(x2, t2, w2, "none")
    jax.block_until_ready((lm2, ls2, ln2))
    rm2, rs2, rn2 = refs(x2, t2, w2)
    assert jnp.allclose(lm2, rm2, rtol=1e-5, atol=1e-5)
    assert jnp.allclose(ls2, rs2, rtol=1e-5, atol=1e-4)
    assert jnp.allclose(ln2, rn2, rtol=1e-5, atol=1e-5)

    # Case 3: multi-block, even block count -> unconditional 2-group split
    # with no masking (block_rows override keeps test data small).
    k1, k2, k3, key = jax.random.split(key, 4)
    shape3 = (4, 8, 128, 128)
    x3 = jax.random.normal(k1, shape3, dtype=jnp.float32)
    t3 = jax.random.normal(k2, shape3, dtype=jnp.float32)
    w3 = jax.random.uniform(k3, shape3, dtype=jnp.float32)
    lm3 = weighted_mse_loss(x3, t3, w3, "mean", block_rows=1024)
    ls3 = weighted_mse_loss(x3, t3, w3, "sum", block_rows=1024)
    ln3 = weighted_mse_loss(x3, t3, w3, "none", block_rows=1024)
    jax.block_until_ready((lm3, ls3, ln3))
    rm3, rs3, rn3 = refs(x3, t3, w3)
    assert jnp.allclose(lm3, rm3, rtol=5e-4, atol=1e-4)
    assert jnp.allclose(ls3, rs3, rtol=5e-4, atol=1e-2)
    assert jnp.allclose(ln3, rn3, rtol=1e-5, atol=1e-5)

    # Case 4: odd block count -> clamped overhang step on the 2-group split.
    k1, k2, k3, key = jax.random.split(key, 4)
    shape4 = (5, 8, 128, 128)
    x4 = jax.random.normal(k1, shape4, dtype=jnp.float32)
    t4 = jax.random.normal(k2, shape4, dtype=jnp.float32)
    w4 = jax.random.uniform(k3, shape4, dtype=jnp.float32)
    lm4 = weighted_mse_loss(x4, t4, w4, "mean", block_rows=2048)
    ls4 = weighted_mse_loss(x4, t4, w4, "sum", block_rows=2048)
    jax.block_until_ready((lm4, ls4))
    rm4, rs4, _ = refs(x4, t4, w4)
    assert jnp.allclose(lm4, rm4, rtol=5e-4, atol=1e-4)
    assert jnp.allclose(ls4, rs4, rtol=5e-4, atol=1e-2)

    # weight=None path (plain-JAX L1 fallback).
    l1 = weighted_mse_loss(x, t, None, "mean")
    assert jnp.allclose(l1, jnp.mean(jnp.abs(x - t)), rtol=1e-5, atol=1e-5)

    print("KERNEL_OK")
</pallas_src>

<mosaic_0001>
module attributes {stable_mosaic.version = 11 : i64} {
  func.func @_reduce_kernel_mean(%arg0: i32, %arg1: i32, %arg2: memref<16x128xf32, #tpu.memory_space<vmem>>, %arg3: memref<16x128xf32, #tpu.memory_space<vmem>>, %arg4: memref<16x128xf32, #tpu.memory_space<vmem>>, %arg5: memref<8x128xf32, #tpu.memory_space<vmem>>, %arg6: memref<8x128xf32, #tpu.memory_space<vmem>>) attributes {dimension_semantics = [#tpu.dimension_semantics<parallel>, #tpu.dimension_semantics<arbitrary>], iteration_bounds = array<i64: 1, 1>, scalar_prefetch = 0 : i64, scratch_operands = 0 : i64, tpu.core_type = #tpu.core_type<tc>, window_params = [{transform_indices = @transform_0, window_bounds = array<i64: 16, 128>}, {transform_indices = @transform_1, window_bounds = array<i64: 16, 128>}, {transform_indices = @transform_2, window_bounds = array<i64: 16, 128>}, {transform_indices = @transform_3, window_bounds = array<i64: 8, 128>}, {transform_indices = @transform_4, window_bounds = array<i64: 8, 128>}]} {
    %c0_i32 = arith.constant 0 : i32
    %0 = arith.cmpi eq, %arg1, %c0_i32 : i32
    %1 = arith.extui %0 : i1 to i32
    %c0_i32_0 = arith.constant 0 : i32
    %2 = arith.cmpi ne, %1, %c0_i32_0 : i32
    scf.if %2 {
      %cst_15 = arith.constant 0.000000e+00 : f32
      %19 = vector.broadcast %cst_15 : f32 to vector<8x128xf32>
      %c0_16 = arith.constant 0 : index
      %c0_17 = arith.constant 0 : index
      %20 = vector.load %arg5[%c0_16, %c0_17] : memref<8x128xf32, #tpu.memory_space<vmem>>, vector<8x128xf32>
      tpu.vector_store %arg5[%c0_16, %c0_17], %19 {strides = array<i32>} : memref<8x128xf32, #tpu.memory_space<vmem>>, vector<8x128xf32>,
      %cst_18 = arith.constant 0.000000e+00 : f32
      %21 = vector.broadcast %cst_18 : f32 to vector<8x128xf32>
      %c0_19 = arith.constant 0 : index
      %c0_20 = arith.constant 0 : index
      %22 = vector.load %arg6[%c0_19, %c0_20] : memref<8x128xf32, #tpu.memory_space<vmem>>, vector<8x128xf32>
      tpu.vector_store %arg6[%c0_19, %c0_20], %21 {strides = array<i32>} : memref<8x128xf32, #tpu.memory_space<vmem>>, vector<8x128xf32>,
    } else {
    }
    %c0 = arith.constant 0 : index
    %c0_1 = arith.constant 0 : index
    %3 = vector.load %arg2[%c0, %c0_1] : memref<16x128xf32, #tpu.memory_space<vmem>>, vector<16x128xf32>
    %c0_2 = arith.constant 0 : index
    %c0_3 = arith.constant 0 : index
    %4 = vector.load %arg3[%c0_2, %c0_3] : memref<16x128xf32, #tpu.memory_space<vmem>>, vector<16x128xf32>
    %c0_4 = arith.constant 0 : index
    %c0_5 = arith.constant 0 : index
    %5 = vector.load %arg4[%c0_4, %c0_5] : memref<16x128xf32, #tpu.memory_space<vmem>>, vector<16x128xf32>
    %6 = arith.subf %3, %4 : vector<16x128xf32>
    %7 = arith.mulf %6, %6 : vector<16x128xf32>
    %8 = arith.mulf %7, %5 : vector<16x128xf32>
    %c0_6 = arith.constant 0 : index
    %c0_7 = arith.constant 0 : index
    %9 = vector.load %arg5[%c0_6, %c0_7] : memref<8x128xf32, #tpu.memory_space<vmem>>, vector<8x128xf32>
    %10 = vector.shape_cast %8 : vector<16x128xf32> to vector<2x8x128xf32>
    %cst = arith.constant dense<0.000000e+00> : vector<8x128xf32>
    %11 = vector.multi_reduction <add>, %10, %cst [0] : vector<2x8x128xf32> to vector<8x128xf32>
    %12 = arith.addf %9, %11 : vector<8x128xf32>
    %c0_8 = arith.constant 0 : index
    %c0_9 = arith.constant 0 : index
    %13 = vector.load %arg5[%c0_8, %c0_9] : memref<8x128xf32, #tpu.memory_space<vmem>>, vector<8x128xf32>
    tpu.vector_store %arg5[%c0_8, %c0_9], %12 {strides = array<i32>} : memref<8x128xf32, #tpu.memory_space<vmem>>, vector<8x128xf32>,
    %c0_10 = arith.constant 0 : index
    %c0_11 = arith.constant 0 : index
    %14 = vector.load %arg6[%c0_10, %c0_11] : memref<8x128xf32, #tpu.memory_space<vmem>>, vector<8x128xf32>
    %15 = vector.shape_cast %5 : vector<16x128xf32> to vector<2x8x128xf32>
    %cst_12 = arith.constant dense<0.000000e+00> : vector<8x128xf32>
    %16 = vector.multi_reduction <add>, %15, %cst_12 [0] : vector<2x8x128xf32> to vector<8x128xf32>
    %17 = arith.addf %14, %16 : vector<8x128xf32>
    %c0_13 = arith.constant 0 : index
    %c0_14 = arith.constant 0 : index
    %18 = vector.load %arg6[%c0_13, %c0_14] : memref<8x128xf32, #tpu.memory_space<vmem>>, vector<8x128xf32>
    tpu.vector_store %arg6[%c0_13, %c0_14], %17 {strides = array<i32>} : memref<8x128xf32, #tpu.memory_space<vmem>>, vector<8x128xf32>,
    return
  }
  func.func @transform_0(%arg0: i32, %arg1: i32) -> (i32, i32) {
    %c1_i32 = arith.constant 1 : i32
    %0 = arith.muli %arg0, %c1_i32 : i32
    %1 = arith.addi %0, %arg1 : i32
    %c0_i32 = arith.constant 0 : i32
    %2 = arith.minsi %1, %c0_i32 : i32
    %c0_i32_0 = arith.constant 0 : i32
    %c0_i32_1 = arith.constant 0 : i32
    return %2, %c0_i32_0 : i32, i32
  }
  func.func @transform_1(%arg0: i32, %arg1: i32) -> (i32, i32) {
    %c1_i32 = arith.constant 1 : i32
    %0 = arith.muli %arg0, %c1_i32 : i32
    %1 = arith.addi %0, %arg1 : i32
    %c0_i32 = arith.constant 0 : i32
    %2 = arith.minsi %1, %c0_i32 : i32
    %c0_i32_0 = arith.constant 0 : i32
    %c0_i32_1 = arith.constant 0 : i32
    return %2, %c0_i32_0 : i32, i32
  }
  func.func @transform_2(%arg0: i32, %arg1: i32) -> (i32, i32) {
    %c1_i32 = arith.constant 1 : i32
    %0 = arith.muli %arg0, %c1_i32 : i32
    %1 = arith.addi %0, %arg1 : i32
    %c0_i32 = arith.constant 0 : i32
    %2 = arith.minsi %1, %c0_i32 : i32
    %c0_i32_0 = arith.constant 0 : i32
    %c0_i32_1 = arith.constant 0 : i32
    return %2, %c0_i32_0 : i32, i32
  }
  func.func @transform_3(%arg0: i32, %arg1: i32) -> (i32, i32) {
    %c0_i32 = arith.constant 0 : i32
    %c0_i32_0 = arith.constant 0 : i32
    return %arg0, %c0_i32 : i32, i32
  }
  func.func @transform_4(%arg0: i32, %arg1: i32) -> (i32, i32) {
    %c0_i32 = arith.constant 0 : i32
    %c0_i32_0 = arith.constant 0 : i32
    return %arg0, %c0_i32 : i32, i32
  }
}

</mosaic_0001>

<llo_original>
// kernel: tpu_custom_call.1
$region0: #{tpu_custom_call.1}
  #allocation0 [shape = 'u32[]', space=smem, size = 0x4, offset = 0x4, fixed_abs, tag = 'smem constant byte address 0x4 - core index']
  #allocation1 [shape = 'u32[72,128]{1,0:T(1,128)}', space=vmem, size = 0x9000, scoped, tag = 'internal scratch']
  %s0 = inlined_call_operand.hbm [shape: f32[16,128], index: 0, kind: input, shape index: {}]
  %s1 = inlined_call_operand.hbm [shape: f32[16,128], index: 1, kind: input, shape index: {}]
  %s2 = inlined_call_operand.hbm [shape: f32[16,128], index: 2, kind: input, shape index: {}]
  %s3 = inlined_call_operand.hbm [shape: f32[8,128], index: 3, kind: output, shape index: {0}]
  %s4 = inlined_call_operand.hbm [shape: f32[8,128], index: 4, kind: output, shape index: {1}]
  %5 = xla_tuple %s3, %s4
  %s6 = sld [smem:[#allocation0]]
  $region46: #{tpu_custom_call.1} parent=0
    _
  %s8 = ssub.s32 1, %s6
  %s9 = scalar_select 0, %s8, %s6
  $region1: #{tpu_custom_call.1} parent=0
    #allocation2 [shape = 'u8[8192]{0}', space=vmem, size = 0x2000, scoped, tag = 'input window, operand 0, single buffered']
    #allocation3 [shape = 's32[1]{0}', space=sflag, size = 0x4, scoped, tag = 'scoped memory for tpu_custom_call.1']
    #allocation4 [shape = 's32[1]{0}', space=sflag, size = 0x4, scoped, tag = 'scoped memory for tpu_custom_call.1']
    #allocation5 [shape = 'u8[8192]{0}', space=vmem, size = 0x2000, scoped, tag = 'input window, operand 1, single buffered']
    #allocation6 [shape = 's32[1]{0}', space=sflag, size = 0x4, scoped, tag = 'scoped memory for tpu_custom_call.1']
    #allocation7 [shape = 'u8[8192]{0}', space=vmem, size = 0x2000, scoped, tag = 'input window, operand 2, single buffered']
    #allocation8 [shape = 'u8[4096]{0}', space=vmem, size = 0x1000, scoped, tag = 'output window, operand 0, single buffered']
    #allocation9 [shape = 'u8[4096]{0}', space=vmem, size = 0x1000, scoped, tag = 'output window, operand 1, single buffered']
    #allocation10 [shape = 's32[1]{0}', space=sflag, size = 0x4, scoped, tag = 'scoped memory for tpu_custom_call.1']
    %10 = vsyncpa [#allocation3], 0
    %11 = vsyncpa [#allocation6], 0
    %12 = vsyncpa [#allocation4], 0
    %13 = vsyncpa [#allocation10], 0
    // Predicated region
    $region2: #{tpu_custom_call.1} parent=1 // pred_check
      _
    $region3: #{tpu_custom_call.1} parent=1 // pred_check_branch
      %15 = sbr.rel (0) target = $region5
    $region4: #{tpu_custom_call.1} parent=1 // pred_region
      %s16 = sadd.s32 0, 0
      %p17 = scmp.lt.s32.totalorder %s16, 0
      %s18 = scalar_select %p17, %s16, 0
      %s19 = smul.u32 2, %s18
      %21 = vsyncadd [#allocation3], 0
      %s22 = smul.addr %s19, 8
      %s23 = scalar_lea.hbm %s0, %s22
      %s24 = sshll.u32 %s23, 4
      %s25 = int_to_ptr.hbm [resolvable:$true] %s24
      %s26 = sshll.u32 [#allocation2], 4
      %s27 = int_to_ptr.vmem [resolvable:$true] %s26
      %32 = dma.hbm_to_vmem [thread:$0]  %s25, 256, %s27, [#allocation3], 128, 128, 8
    $region5: #{tpu_custom_call.1} parent=1 // pred_fallthru
      _
    // Predicated region
    $region6: #{tpu_custom_call.1} parent=1 // pred_check
      _
    $region7: #{tpu_custom_call.1} parent=1 // pred_check_branch
      %34 = sbr.rel (0) target = $region9
    $region8: #{tpu_custom_call.1} parent=1 // pred_region
      %s35 = sadd.s32 0, 0
      %p36 = scmp.lt.s32.totalorder %s35, 0
      %s37 = scalar_select %p36, %s35, 0
      %s38 = smul.u32 2, %s37
      %40 = vsyncadd [#allocation6], 0
      %s41 = smul.addr %s38, 8
      %s42 = scalar_lea.hbm %s1, %s41
      %s43 = sshll.u32 %s42, 4
      %s44 = int_to_ptr.hbm [resolvable:$true] %s43
      %s45 = sshll.u32 [#allocation5], 4
      %s46 = int_to_ptr.vmem [resolvable:$true] %s45
      %51 = dma.hbm_to_vmem [thread:$0]  %s44, 256, %s46, [#allocation6], 128, 128, 8
    $region9: #{tpu_custom_call.1} parent=1 // pred_fallthru
      _
    // Predicated region
    $region10: #{tpu_custom_call.1} parent=1 // pred_check
      _
    $region11: #{tpu_custom_call.1} parent=1 // pred_check_branch
      %53 = sbr.rel (0) target = $region13
    $region12: #{tpu_custom_call.1} parent=1 // pred_region
      %s54 = sadd.s32 0, 0
      %p55 = scmp.lt.s32.totalorder %s54, 0
      %s56 = scalar_select %p55, %s54, 0
      %s57 = smul.u32 2, %s56
      %59 = vsyncadd [#allocation6], 0
      %s60 = smul.addr %s57, 8
      %s61 = scalar_lea.hbm %s2, %s60
      %s62 = sshll.u32 %s61, 4
      %s63 = int_to_ptr.hbm [resolvable:$true] %s62
      %s64 = sshll.u32 [#allocation7], 4
      %s65 = int_to_ptr.vmem [resolvable:$true] %s64
      %70 = dma.hbm_to_vmem [thread:$0]  %s63, 256, %s65, [#allocation6], 128, 128, 8
    $region13: #{tpu_custom_call.1} parent=1 // pred_fallthru
      _
    // Predicated region
    $region14: #{tpu_custom_call.1} parent=1 // pred_check
      _
    $region15: #{tpu_custom_call.1} parent=1 // pred_check_branch
      %72 = sbr.rel (0) target = $region17
    $region16: #{tpu_custom_call.1} parent=1 // pred_region
      %74 = dma.done [#allocation3], 256
    $region17: #{tpu_custom_call.1} parent=1 // pred_fallthru
      _
    // Predicated region
    $region18: #{tpu_custom_call.1} parent=1 // pred_check
      _
    $region19: #{tpu_custom_call.1} parent=1 // pred_check_branch
      %76 = sbr.rel (0) target = $region21
    $region20: #{tpu_custom_call.1} parent=1 // pred_region
      %78 = dma.done [#allocation6], 256
    $region21: #{tpu_custom_call.1} parent=1 // pred_fallthru
      _
    // Predicated region
    $region22: #{tpu_custom_call.1} parent=1 // pred_check
      _
    $region23: #{tpu_custom_call.1} parent=1 // pred_check_branch
      %80 = sbr.rel (0) target = $region25
    $region24: #{tpu_custom_call.1} parent=1 // pred_region
      %82 = dma.done [#allocation6], 256
    $region25: #{tpu_custom_call.1} parent=1 // pred_fallthru
      _
    %s83 = sadd.s32 0, 0
    %p84 = scmp.lt.s32.totalorder %s83, 0
    %s85 = scalar_select %p84, %s83, 0
    %s86 = smul.u32 2, %s85
    %s87 = sadd.s32 0, 0
    %p88 = scmp.lt.s32.totalorder %s87, 0
    %s89 = scalar_select %p88, %s87, 0
    %s90 = smul.u32 2, %s89
    %s91 = sadd.s32 0, 0
    %p92 = scmp.lt.s32.totalorder %s91, 0
    %s93 = scalar_select %p92, %s91, 0
    %s94 = smul.u32 2, %s93
    %p95 = scmp.eq.s32.totalorder 0, 0
    // Predicated region
    $region26: #{tpu_custom_call.1} parent=1 // pred_check
      %p96 = pneg %p95
    $region27: #{tpu_custom_call.1} parent=1 // pred_check_branch
      %98 = sbr.rel (%p96) target = $region29
    $region28: #{tpu_custom_call.1} parent=1 // pred_region
      %99 = vst [vmem:[#allocation8] sm:$0xff] 0.0
      %100 = vst [vmem:[#allocation9] sm:$0xff] 0.0
    $region29: #{tpu_custom_call.1} parent=1 // pred_fallthru
      _
    %v101 = vld [vmem:[#allocation2] sm:$0xff]
    %v102 = vld [vmem:[#allocation2 + $0x8] sm:$0xff]
    %v103 = vld [vmem:[#allocation5] sm:$0xff]
    %v104 = vld [vmem:[#allocation5 + $0x8] sm:$0xff]
    %v105 = vld [vmem:[#allocation7] sm:$0xff]
    %v106 = vld [vmem:[#allocation7 + $0x8] sm:$0xff]
    %v107 = vsub.f32 %v101, %v103
    %v108 = vsub.f32 %v102, %v104
    %v109 = vmul.f32 %v107, %v107
    %v110 = vmul.f32 %v108, %v108
    %v111 = vmul.f32 %v109, %v105
    %v112 = vmul.f32 %v110, %v106
    %v113 = vld [vmem:[#allocation8] sm:$0xff]
    %v114 = vadd.f32 %v111, %v112
    %v115 = vadd.f32 %v113, %v114
    %116 = vst [vmem:[#allocation8] sm:$0xff] %v115
    %v117 = vld [vmem:[#allocation9] sm:$0xff]
    %v118 = vadd.f32 %v105, %v106
    %v119 = vadd.f32 %v117, %v118
    %120 = vst [vmem:[#allocation9] sm:$0xff] %v119
    // Predicated region
    $region30: #{tpu_custom_call.1} parent=1 // pred_check
      _
    $region31: #{tpu_custom_call.1} parent=1 // pred_check_branch
      %122 = sbr.rel (0) target = $region33
    $region32: #{tpu_custom_call.1} parent=1 // pred_region
      %124 = vsyncadd [#allocation4], 0
      %s126 = sshll.u32 [#allocation8], 4
      %s127 = int_to_ptr.vmem [resolvable:$true] %s126
      %s128 = sshll.u32 %s3, 4
      %s129 = int_to_ptr.hbm [resolvable:$true] %s128
      %131 = dma.vmem_to_hbm [thread:$0]  %s127, 128, %s129, [#allocation4]
    $region33: #{tpu_custom_call.1} parent=1 // pred_fallthru
      _
    // Predicated region
    $region34: #{tpu_custom_call.1} parent=1 // pred_check
      _
    $region35: #{tpu_custom_call.1} parent=1 // pred_check_branch
      %133 = sbr.rel (0) target = $region37
    $region36: #{tpu_custom_call.1} parent=1 // pred_region
      %135 = vsyncadd [#allocation10], 0
      %s137 = sshll.u32 [#allocation9], 4
      %s138 = int_to_ptr.vmem [resolvable:$true] %s137
      %s139 = sshll.u32 %s4, 4
      %s140 = int_to_ptr.hbm [resolvable:$true] %s139
      %142 = dma.vmem_to_hbm [thread:$0]  %s138, 128, %s140, [#allocation10]
    $region37: #{tpu_custom_call.1} parent=1 // pred_fallthru
      _
    // Predicated region
    $region38: #{tpu_custom_call.1} parent=1 // pred_check
      _
    $region39: #{tpu_custom_call.1} parent=1 // pred_check_branch
      %144 = sbr.rel (0) target = $region41
    $region40: #{tpu_custom_call.1} parent=1 // pred_region
      %146 = dma.done [#allocation4], 128
    $region41: #{tpu_custom_call.1} parent=1 // pred_fallthru
      _
    // Predicated region
    $region42: #{tpu_custom_call.1} parent=1 // pred_check
      _
    $region43: #{tpu_custom_call.1} parent=1 // pred_check_branch
      %148 = sbr.rel (0) target = $region45
    $region44: #{tpu_custom_call.1} parent=1 // pred_region
      %150 = dma.done [#allocation10], 128
    $region45: #{tpu_custom_call.1} parent=1 // pred_fallthru
      _
    %151 = vsyncpa [#allocation3], 1
    %152 = vsyncpa [#allocation6], 1
    %153 = vsyncpa [#allocation4], 1
    %154 = vsyncpa [#allocation10], 1

</llo_original>
